<compile_context>
chip_gen: v6e
topology: v6e:2x2x1
jax: 0.10.0
libtpu: 0.0.40
codegen_flags: <defaults>
</compile_context>

<pallas_src>
import jax
import jax.numpy as jnp
import numpy as np
from jax.experimental import pallas as pl
from jax.experimental.pallas import tpu as pltpu

# ---- static configuration (mirrors CNN_Text.__init__ hyper-params) ----
VOCAB = 50                 # len(word2idx)
EMBED = 32                 # config.emsize
N_CLASSES = 4              # config.class_number
KNUM = 8                   # config.kernel_num
KERNEL_SIZES = (3, 4, 5)   # config.kernel_sizes = "3,4,5"
N_CONVS = len(KERNEL_SIZES)
MAX_WS = max(KERNEL_SIZES)
SEQ_LEN = 16
BATCH = 2

PAD = MAX_WS - 1                       # common left zero-padding (4)
R = SEQ_LEN + MAX_WS - 1               # rows covering every conv's valid outputs (20)
R_PAD = ((R + 7) // 8) * 8             # sublane-aligned rows per batch (24)
FEAT = N_CONVS * KNUM                  # pooled feature width (24)
VPAD = ((VOCAB + 7) // 8) * 8          # vocab padded so slab tap blocks stay 8-aligned (56)
M_ROWS = BATCH * R_PAD                 # fused matmul M dim (48)
SENT = R_PAD - SEQ_LEN                 # sentinel rows around each token column (8)

# packed-constant slab row offsets (all multiples of 8 -> aligned ref slices)
MASK_OFF = MAX_WS * VPAD               # 280 : mask-with-bias  (R_PAD, FEAT)
FCW_OFF = MASK_OFF + R_PAD             # 304 : fc weight, lane-padded (FEAT, FEAT)
FCB_OFF = FCW_OFF + FEAT               # 328 : fc bias, lane-padded   (1, FEAT)
SLAB_ROWS = FCB_OFF + 1                # 329
assert MASK_OFF % 8 == 0 and FCW_OFF % 8 == 0 and FCB_OFF % 8 == 0
assert SENT >= PAD and PAD + MAX_WS - 1 + R_PAD <= SEQ_LEN + 2 * SENT


def cnn_text_kernel(tok_ref, slab_ref, out_ref):
    # tok_ref : (SEQ_LEN, BATCH) int32  -- raw tokens, exactly the PyTorch input layout
    # slab_ref: (SLAB_ROWS, FEAT) f32   -- [wcomb taps | mask+bias | fcW | fcb]
    # out_ref : (BATCH, FEAT + C) f32   -- cols [0,FEAT)=feat, [FEAT,FEAT+C)=logits
    tok = tok_ref[...]                                           # (S, B) int32
    sent = jnp.full((SENT, 1), -1, jnp.int32)                    # never matches a token id
    # per-batch padded token column: [sent(8) | tokens(16) | sent(8)]  (8-aligned pieces)
    base_cols = [jnp.concatenate([sent, tok[:, b:b + 1], sent], axis=0)
                 for b in range(BATCH)]                          # each (S + 2*SENT, 1)

    lane_iota = jax.lax.broadcasted_iota(jnp.int32, (M_ROWS, VPAD), 1)
    one = jnp.float32(1.0)
    zero = jnp.float32(0.0)

    # Accumulate conv pre-activations for all convs / taps / both batch rows:
    #   y[b*R_PAD + r, k*N_CONVS + s] = sum_w emb[tok[b, r+w-PAD]] . W_s[k, w, :]
    # Each tap is one one-hot(token) @ (emb @ convW_tap) matmul; the embedding
    # gather is folded into the precomputed slab, so no gather happens here.
    y = jnp.zeros((M_ROWS, FEAT), jnp.float32)
    for w in range(MAX_WS):
        # shifted token column: row b*R_PAD + r holds tok[b, r + w - PAD] (or -1)
        cols = [bc[w + PAD:w + PAD + R_PAD, :] for bc in base_cols]   # static slices
        tok_shift = jnp.concatenate(cols, axis=0)                # (M_ROWS, 1) int32
        oh = jnp.where(lane_iota == tok_shift, one, zero)        # (M_ROWS, VPAD) one-hot
        wblk = slab_ref[pl.ds(w * VPAD, VPAD), :]                # (VPAD, FEAT) emb@conv tap w
        y = y + jnp.dot(oh, wblk, preferred_element_type=jnp.float32)

    # Conv bias folded into the mask: valid (conv, time) rows get +bias, invalid
    # rows -1e30.  max_r(z_r) + b == max_r(z_r + b), and ReLU commutes with the max.
    maskbias = slab_ref[pl.ds(MASK_OFF, R_PAD), :]               # (R_PAD, FEAT)
    mask_all = jnp.concatenate([maskbias] * BATCH, axis=0)       # (M_ROWS, FEAT)
    pooled = jnp.max((y + mask_all).reshape(BATCH, R_PAD, FEAT), axis=1)   # time max-pool
    feat = jnp.maximum(pooled, 0.0)                              # ReLU (bias already added)

    # TODO(synk): nn.Dropout omitted (eval-mode identity; no train-time RNG mask).
    fcw = slab_ref[pl.ds(FCW_OFF, FEAT), :]                      # (FEAT, FEAT), cols >= C are 0
    fcb = slab_ref[pl.ds(FCB_OFF, 1), :]                         # (1, FEAT),    cols >= C are 0
    logits = (jnp.dot(feat, fcw, preferred_element_type=jnp.float32)
              + fcb)[:, :N_CLASSES]                              # (BATCH, C)

    out_ref[:, :FEAT] = feat                                     # merged output slab
    out_ref[:, FEAT:FEAT + N_CLASSES] = logits


def _pack_params(emb_table, conv_w_list, conv_b_list, fc_w, fc_b):
    """Parameter-only prep: pack every constant the kernel needs into one f32 slab."""
    # fused conv weight (MAX_WS*E, FEAT): column order k*N_CONVS + s, taps end-padded
    w_blocks = []
    for w_s, ws in zip(conv_w_list, KERNEL_SIZES):               # w_s: (K, ws, E)
        w_pad = jnp.pad(w_s, ((0, 0), (0, MAX_WS - ws), (0, 0)))     # (K, MAX_WS, E)
        w_blocks.append(jnp.transpose(w_pad, (1, 2, 0)).reshape(MAX_WS * EMBED, KNUM))
    convw = (jnp.stack(w_blocks, axis=0)                         # (N_CONVS, MAX_WS*E, K)
             .transpose(1, 2, 0)                                 # (MAX_WS*E, K, N_CONVS)
             .reshape(MAX_WS * EMBED, FEAT))
    # fold the embedding table into each tap: wcomb[w, v, col] = emb[v, :] . convw_tap_w[:, col]
    wcomb = jnp.einsum('ve,wef->wvf', emb_table,
                       convw.reshape(MAX_WS, EMBED, FEAT))       # (MAX_WS, VOCAB, FEAT)
    wcomb = jnp.pad(wcomb, ((0, 0), (0, VPAD - VOCAB), (0, 0))).reshape(MAX_WS * VPAD, FEAT)

    # additive mask with the conv bias folded in (built at trace time)
    valid = np.zeros((R_PAD, FEAT), np.float32)
    for s, ws in enumerate(KERNEL_SIZES):
        valid[MAX_WS - ws:R, s::N_CONVS] = 1.0                   # cols k*N_CONVS + s
    convb = jnp.stack(conv_b_list, axis=1).reshape(1, FEAT)      # col = k*N_CONVS + s
    maskbias = jnp.where(jnp.asarray(valid) > 0, convb, -1e30)   # (R_PAD, FEAT)

    fcw = jnp.pad(fc_w.T, ((0, 0), (0, FEAT - N_CLASSES)))       # (FEAT, FEAT)
    fcb = jnp.pad(fc_b[None, :], ((0, 0), (0, FEAT - N_CLASSES)))  # (1, FEAT)

    slab = jnp.concatenate([wcomb, maskbias, fcw, fcb], axis=0).astype(jnp.float32)
    assert slab.shape == (SLAB_ROWS, FEAT)
    return slab


@jax.jit
def cnn_text_forward(x_tokens, emb_table, conv_w_list, conv_b_list, fc_w, fc_b):
    """x_tokens: (seq_len, batch) int32, same layout the PyTorch forward receives."""
    slab = _pack_params(emb_table, conv_w_list, conv_b_list, fc_w, fc_b)

    out = pl.pallas_call(
        cnn_text_kernel,
        out_shape=jax.ShapeDtypeStruct((BATCH, FEAT + N_CLASSES), jnp.float32),
        # no grid: single invocation, whole arrays resident in VMEM, no pipelining
        in_specs=[pl.BlockSpec(memory_space=pltpu.MemorySpace.VMEM),
                  pl.BlockSpec(memory_space=pltpu.MemorySpace.VMEM)],
        out_specs=pl.BlockSpec(memory_space=pltpu.MemorySpace.VMEM),
    )(x_tokens.astype(jnp.int32), slab)

    feat = out[:, :FEAT]
    logits = out[:, FEAT:]
    return logits, feat                                          # PyTorch return order


def reference_forward(x_tokens, emb_table, conv_w_list, conv_b_list, fc_w, fc_b):
    """Pure-JAX (f32) mirror of the PyTorch forward, for correctness checking."""
    xt = x_tokens.T
    emb = emb_table[xt]                                          # (B, S, E)
    feats = []
    for w_s, b_s, ws in zip(conv_w_list, conv_b_list, KERNEL_SIZES):
        pad = jnp.pad(emb, ((0, 0), (ws - 1, ws - 1), (0, 0)))
        l_out = SEQ_LEN + ws - 1
        out = jnp.zeros((BATCH, l_out, KNUM), jnp.float32)
        for w in range(ws):
            out = out + jnp.einsum('ble,ke->blk', pad[:, w:w + l_out, :], w_s[:, w, :])
        out = jnp.maximum(out + b_s[None, None, :], 0.0)
        feats.append(out.max(axis=1))                            # (B, K)
    feat = jnp.stack(feats, axis=2).reshape(BATCH, FEAT)         # cat(dim=2).view
    logits = feat @ fc_w.T + fc_b
    return logits, feat


if __name__ == "__main__":
    key = jax.random.PRNGKey(0)
    keys = jax.random.split(key, 8)
    # deterministic synthetic parameters (shapes implied by CNN_Text.__init__)
    emb_table = jax.random.normal(keys[0], (VOCAB, EMBED), jnp.float32) * 0.1
    conv_w_list = [jax.random.normal(keys[1 + i], (KNUM, ws, EMBED), jnp.float32) * 0.1
                   for i, ws in enumerate(KERNEL_SIZES)]
    conv_b_list = [jax.random.normal(keys[4 + i], (KNUM,), jnp.float32) * 0.1
                   for i in range(N_CONVS)]
    fc_w = jax.random.normal(keys[7], (N_CLASSES, FEAT), jnp.float32) * 0.1
    fc_b = jnp.linspace(-0.1, 0.1, N_CLASSES, dtype=jnp.float32)

    # input tokens: (seq_len, batch), as the PyTorch forward expects
    x_tokens = jax.random.randint(jax.random.PRNGKey(42), (SEQ_LEN, BATCH),
                                  0, VOCAB, dtype=jnp.int32)

    logits, feat = cnn_text_forward(x_tokens, emb_table, conv_w_list,
                                    conv_b_list, fc_w, fc_b)
    jax.block_until_ready((logits, feat))

    ref_logits, ref_feat = reference_forward(x_tokens, emb_table, conv_w_list,
                                             conv_b_list, fc_w, fc_b)

    assert logits.shape == (BATCH, N_CLASSES) and feat.shape == (BATCH, FEAT)
    # f32 path end-to-end; tolerances still cover any reduced-precision MXU passes
    np.testing.assert_allclose(np.asarray(feat), np.asarray(ref_feat),
                               rtol=1e-2, atol=2e-3)
    np.testing.assert_allclose(np.asarray(logits), np.asarray(ref_logits),
                               rtol=1e-2, atol=2e-3)
    print("KERNEL_OK")
</pallas_src>

<mosaic_0001>
module attributes {stable_mosaic.version = 11 : i64} {
  func.func @cnn_text_kernel(%arg0: memref<16x2xi32, #tpu.memory_space<vmem>>, %arg1: memref<329x24xf32, #tpu.memory_space<vmem>>, %arg2: memref<2x28xf32, #tpu.memory_space<vmem>>) attributes {dimension_semantics = [], scalar_prefetch = 0 : i64, scratch_operands = 0 : i64, tpu.core_type = #tpu.core_type<tc>} {
    %c0 = arith.constant 0 : index
    %c0_0 = arith.constant 0 : index
    %0 = vector.load %arg0[%c0, %c0_0] : memref<16x2xi32, #tpu.memory_space<vmem>>, vector<16x2xi32>
    %c-1_i32 = arith.constant -1 : i32
    %1 = vector.broadcast %c-1_i32 : i32 to vector<8x1xi32>
    %2 = vector.extract_strided_slice %0 {offsets = [0, 0], sizes = [16, 1], strides = [1, 1]} : vector<16x2xi32> to vector<16x1xi32>
    %3 = tpu.concatenate %1, %2, %1 in 0 : vector<8x1xi32>, vector<16x1xi32>, vector<8x1xi32> -> vector<32x1xi32>
    %4 = vector.extract_strided_slice %0 {offsets = [0, 1], sizes = [16, 1], strides = [1, 1]} : vector<16x2xi32> to vector<16x1xi32>
    %5 = tpu.concatenate %1, %4, %1 in 0 : vector<8x1xi32>, vector<16x1xi32>, vector<8x1xi32> -> vector<32x1xi32>
    %6 = tpu.iota {dimensions = array<i32: 1>} : vector<48x56xi32>
    %cst = arith.constant 0.000000e+00 : f32
    %7 = vector.broadcast %cst : f32 to vector<48x24xf32>
    %8 = vector.extract_strided_slice %3 {offsets = [4, 0], sizes = [24, 1], strides = [1, 1]} : vector<32x1xi32> to vector<24x1xi32>
    %9 = vector.extract_strided_slice %5 {offsets = [4, 0], sizes = [24, 1], strides = [1, 1]} : vector<32x1xi32> to vector<24x1xi32>
    %10 = tpu.concatenate %8, %9 in 0 : vector<24x1xi32>, vector<24x1xi32> -> vector<48x1xi32>
    %11 = vector.broadcast %10 : vector<48x1xi32> to vector<48x56xi32>
    %12 = arith.cmpi eq, %6, %11 : vector<48x56xi32>
    %cst_1 = arith.constant 1.000000e+00 : f32
    %cst_2 = arith.constant 0.000000e+00 : f32
    %13 = vector.broadcast %cst_1 : f32 to vector<48x56xf32>
    %14 = vector.broadcast %cst_2 : f32 to vector<48x56xf32>
    %15 = arith.select %12, %13, %14 : vector<48x56xi1>, vector<48x56xf32>
    %c0_3 = arith.constant 0 : index
    %c0_4 = arith.constant 0 : index
    %16 = vector.load %arg1[%c0_3, %c0_4] : memref<329x24xf32, #tpu.memory_space<vmem>>, vector<56x24xf32>
    %cst_5 = arith.constant dense<0.000000e+00> : vector<48x24xf32>
    %17 = tpu.matmul %15, %16, %cst_5 {dimension_numbers = #tpu.dot_dimension_numbers<[1], [0], [0], [1], [0, 0, 1, 1], [], []>} : vector<48x56xf32>, vector<56x24xf32>, vector<48x24xf32> -> vector<48x24xf32>
    %18 = arith.addf %7, %17 : vector<48x24xf32>
    %19 = vector.extract_strided_slice %3 {offsets = [5, 0], sizes = [24, 1], strides = [1, 1]} : vector<32x1xi32> to vector<24x1xi32>
    %20 = vector.extract_strided_slice %5 {offsets = [5, 0], sizes = [24, 1], strides = [1, 1]} : vector<32x1xi32> to vector<24x1xi32>
    %21 = tpu.concatenate %19, %20 in 0 : vector<24x1xi32>, vector<24x1xi32> -> vector<48x1xi32>
    %22 = vector.broadcast %21 : vector<48x1xi32> to vector<48x56xi32>
    %23 = arith.cmpi eq, %6, %22 : vector<48x56xi32>
    %cst_6 = arith.constant 1.000000e+00 : f32
    %cst_7 = arith.constant 0.000000e+00 : f32
    %24 = vector.broadcast %cst_6 : f32 to vector<48x56xf32>
    %25 = vector.broadcast %cst_7 : f32 to vector<48x56xf32>
    %26 = arith.select %23, %24, %25 : vector<48x56xi1>, vector<48x56xf32>
    %c56 = arith.constant 56 : index
    %c0_8 = arith.constant 0 : index
    %27 = vector.load %arg1[%c56, %c0_8] : memref<329x24xf32, #tpu.memory_space<vmem>>, vector<56x24xf32>
    %cst_9 = arith.constant dense<0.000000e+00> : vector<48x24xf32>
    %28 = tpu.matmul %26, %27, %cst_9 {dimension_numbers = #tpu.dot_dimension_numbers<[1], [0], [0], [1], [0, 0, 1, 1], [], []>} : vector<48x56xf32>, vector<56x24xf32>, vector<48x24xf32> -> vector<48x24xf32>
    %29 = arith.addf %18, %28 : vector<48x24xf32>
    %30 = vector.extract_strided_slice %3 {offsets = [6, 0], sizes = [24, 1], strides = [1, 1]} : vector<32x1xi32> to vector<24x1xi32>
    %31 = vector.extract_strided_slice %5 {offsets = [6, 0], sizes = [24, 1], strides = [1, 1]} : vector<32x1xi32> to vector<24x1xi32>
    %32 = tpu.concatenate %30, %31 in 0 : vector<24x1xi32>, vector<24x1xi32> -> vector<48x1xi32>
    %33 = vector.broadcast %32 : vector<48x1xi32> to vector<48x56xi32>
    %34 = arith.cmpi eq, %6, %33 : vector<48x56xi32>
    %cst_10 = arith.constant 1.000000e+00 : f32
    %cst_11 = arith.constant 0.000000e+00 : f32
    %35 = vector.broadcast %cst_10 : f32 to vector<48x56xf32>
    %36 = vector.broadcast %cst_11 : f32 to vector<48x56xf32>
    %37 = arith.select %34, %35, %36 : vector<48x56xi1>, vector<48x56xf32>
    %c112 = arith.constant 112 : index
    %c0_12 = arith.constant 0 : index
    %38 = vector.load %arg1[%c112, %c0_12] : memref<329x24xf32, #tpu.memory_space<vmem>>, vector<56x24xf32>
    %cst_13 = arith.constant dense<0.000000e+00> : vector<48x24xf32>
    %39 = tpu.matmul %37, %38, %cst_13 {dimension_numbers = #tpu.dot_dimension_numbers<[1], [0], [0], [1], [0, 0, 1, 1], [], []>} : vector<48x56xf32>, vector<56x24xf32>, vector<48x24xf32> -> vector<48x24xf32>
    %40 = arith.addf %29, %39 : vector<48x24xf32>
    %41 = vector.extract_strided_slice %3 {offsets = [7, 0], sizes = [24, 1], strides = [1, 1]} : vector<32x1xi32> to vector<24x1xi32>
    %42 = vector.extract_strided_slice %5 {offsets = [7, 0], sizes = [24, 1], strides = [1, 1]} : vector<32x1xi32> to vector<24x1xi32>
    %43 = tpu.concatenate %41, %42 in 0 : vector<24x1xi32>, vector<24x1xi32> -> vector<48x1xi32>
    %44 = vector.broadcast %43 : vector<48x1xi32> to vector<48x56xi32>
    %45 = arith.cmpi eq, %6, %44 : vector<48x56xi32>
    %cst_14 = arith.constant 1.000000e+00 : f32
    %cst_15 = arith.constant 0.000000e+00 : f32
    %46 = vector.broadcast %cst_14 : f32 to vector<48x56xf32>
    %47 = vector.broadcast %cst_15 : f32 to vector<48x56xf32>
    %48 = arith.select %45, %46, %47 : vector<48x56xi1>, vector<48x56xf32>
    %c168 = arith.constant 168 : index
    %c0_16 = arith.constant 0 : index
    %49 = vector.load %arg1[%c168, %c0_16] : memref<329x24xf32, #tpu.memory_space<vmem>>, vector<56x24xf32>
    %cst_17 = arith.constant dense<0.000000e+00> : vector<48x24xf32>
    %50 = tpu.matmul %48, %49, %cst_17 {dimension_numbers = #tpu.dot_dimension_numbers<[1], [0], [0], [1], [0, 0, 1, 1], [], []>} : vector<48x56xf32>, vector<56x24xf32>, vector<48x24xf32> -> vector<48x24xf32>
    %51 = arith.addf %40, %50 : vector<48x24xf32>
    %52 = vector.extract_strided_slice %3 {offsets = [8, 0], sizes = [24, 1], strides = [1, 1]} : vector<32x1xi32> to vector<24x1xi32>
    %53 = vector.extract_strided_slice %5 {offsets = [8, 0], sizes = [24, 1], strides = [1, 1]} : vector<32x1xi32> to vector<24x1xi32>
    %54 = tpu.concatenate %52, %53 in 0 : vector<24x1xi32>, vector<24x1xi32> -> vector<48x1xi32>
    %55 = vector.broadcast %54 : vector<48x1xi32> to vector<48x56xi32>
    %56 = arith.cmpi eq, %6, %55 : vector<48x56xi32>
    %cst_18 = arith.constant 1.000000e+00 : f32
    %cst_19 = arith.constant 0.000000e+00 : f32
    %57 = vector.broadcast %cst_18 : f32 to vector<48x56xf32>
    %58 = vector.broadcast %cst_19 : f32 to vector<48x56xf32>
    %59 = arith.select %56, %57, %58 : vector<48x56xi1>, vector<48x56xf32>
    %c224 = arith.constant 224 : index
    %c0_20 = arith.constant 0 : index
    %60 = vector.load %arg1[%c224, %c0_20] : memref<329x24xf32, #tpu.memory_space<vmem>>, vector<56x24xf32>
    %cst_21 = arith.constant dense<0.000000e+00> : vector<48x24xf32>
    %61 = tpu.matmul %59, %60, %cst_21 {dimension_numbers = #tpu.dot_dimension_numbers<[1], [0], [0], [1], [0, 0, 1, 1], [], []>} : vector<48x56xf32>, vector<56x24xf32>, vector<48x24xf32> -> vector<48x24xf32>
    %62 = arith.addf %51, %61 : vector<48x24xf32>
    %c280 = arith.constant 280 : index
    %c0_22 = arith.constant 0 : index
    %63 = vector.load %arg1[%c280, %c0_22] : memref<329x24xf32, #tpu.memory_space<vmem>>, vector<24x24xf32>
    %64 = tpu.concatenate %63, %63 in 0 : vector<24x24xf32>, vector<24x24xf32> -> vector<48x24xf32>
    %65 = arith.addf %62, %64 : vector<48x24xf32>
    %66 = vector.shape_cast %65 : vector<48x24xf32> to vector<2x24x24xf32>
    %cst_23 = arith.constant dense<0xFF800000> : vector<2x24xf32>
    %67 = vector.multi_reduction <maximumf>, %66, %cst_23 [1] : vector<2x24x24xf32> to vector<2x24xf32>
    %cst_24 = arith.constant 0.000000e+00 : f32
    %68 = vector.broadcast %cst_24 : f32 to vector<2x24xf32>
    %69 = arith.maximumf %67, %68 : vector<2x24xf32>
    %c304 = arith.constant 304 : index
    %c0_25 = arith.constant 0 : index
    %70 = vector.load %arg1[%c304, %c0_25] : memref<329x24xf32, #tpu.memory_space<vmem>>, vector<24x24xf32>
    %c328 = arith.constant 328 : index
    %c0_26 = arith.constant 0 : index
    %71 = vector.load %arg1[%c328, %c0_26] : memref<329x24xf32, #tpu.memory_space<vmem>>, vector<1x24xf32>
    %cst_27 = arith.constant dense<0.000000e+00> : vector<2x24xf32>
    %72 = tpu.matmul %69, %70, %cst_27 {dimension_numbers = #tpu.dot_dimension_numbers<[1], [0], [0], [1], [0, 0, 1, 1], [], []>} : vector<2x24xf32>, vector<24x24xf32>, vector<2x24xf32> -> vector<2x24xf32>
    %73 = vector.broadcast %71 : vector<1x24xf32> to vector<2x24xf32>
    %74 = arith.addf %72, %73 : vector<2x24xf32>
    %75 = vector.extract_strided_slice %74 {offsets = [0, 0], sizes = [2, 4], strides = [1, 1]} : vector<2x24xf32> to vector<2x4xf32>
    %c0_28 = arith.constant 0 : index
    %c0_29 = arith.constant 0 : index
    %76 = vector.load %arg2[%c0_28, %c0_29] : memref<2x28xf32, #tpu.memory_space<vmem>>, vector<2x24xf32>
    tpu.vector_store %arg2[%c0_28, %c0_29], %69 {strides = array<i32>} : memref<2x28xf32, #tpu.memory_space<vmem>>, vector<2x24xf32>,
    %c0_30 = arith.constant 0 : index
    %c24 = arith.constant 24 : index
    %77 = vector.load %arg2[%c0_30, %c24] : memref<2x28xf32, #tpu.memory_space<vmem>>, vector<2x4xf32>
    tpu.vector_store %arg2[%c0_30, %c24], %75 {strides = array<i32>} : memref<2x28xf32, #tpu.memory_space<vmem>>, vector<2x4xf32>,
    return
  }
}

</mosaic_0001>

<llo_original>
// kernel: cnn_text_forward.1
$region0: #{cnn_text_forward.1}
  #allocation0 [shape = 'u32[]', space=smem, size = 0x4, offset = 0x4, fixed_abs, tag = 'smem constant byte address 0x4 - core index']
  #allocation1 [shape = 'u32[144,128]{1,0:T(1,128)}', space=vmem, size = 0x12000, scoped, tag = 'internal scratch']
  %s0 = inlined_call_operand.vmem [shape: s32[16,2], index: 0, kind: input, shape index: {}]
  %s1 = inlined_call_operand.vmem [shape: f32[329,24], index: 1, kind: input, shape index: {}]
  %s2 = inlined_call_operand.vmem [shape: f32[2,28], index: 2, kind: output, shape index: {}]
  %s3 = sld [smem:[#allocation0]]
  $region18: #{cnn_text_forward.1} parent=0
    _
  %s5 = ssub.s32 1, %s3
  %s6 = scalar_select 0, %s5, %s3
  // Predicated region
  $region2: #{cnn_text_forward.1} parent=0 // pred_check
    _
  $region3: #{cnn_text_forward.1} parent=0 // pred_check_branch
    %8 = sbr.rel (0) target = $region5
  $region4: #{cnn_text_forward.1} parent=0 // pred_region
    _
  $region5: #{cnn_text_forward.1} parent=0 // pred_fallthru
    _
  // Predicated region
  $region6: #{cnn_text_forward.1} parent=0 // pred_check
    _
  $region7: #{cnn_text_forward.1} parent=0 // pred_check_branch
    %10 = sbr.rel (0) target = $region9
  $region8: #{cnn_text_forward.1} parent=0 // pred_region
    _
  $region9: #{cnn_text_forward.1} parent=0 // pred_fallthru
    _
  %v11 = vld [vmem:[%s0] sm:$0xff]
  %v12 = vld [vmem:[%s0 + $0x8] sm:$0xff]
  %13 = vrot.lane.b32.xlu0 %v11, 127
  %v14 = vpop.permute.xlu0 %13
  %15 = vrot.lane.b32.xlu0 %v12, 127
  %v16 = vpop.permute.xlu0 %15
  %v17 = vlaneseq
  %v18 = vand.u32 %v17, 127
  %vm19 = vcmask 1043456
  %v20 = vrot.slane %v11, 4
  %v21 = vsel %vm19, 4294967295, %v20
  %v22 = vrot.slane %v12, 4
  %v23 = vsel %vm19, %v20, %v22
  %v24 = vsel %vm19, %v22, 4294967295
  %v25 = vrot.slane %v14, 4
  %v26 = vsel %vm19, 4294967295, %v25
  %v27 = vrot.slane %v16, 4
  %v28 = vsel %vm19, %v25, %v27
  %v29 = vsel %vm19, %v27, 4294967295
  %30 = vset.pattern.permute.xlu0 0
  %31 = vperm.xlu0 %30, %v21
  %v32 = vpop.permute.xlu0 %31
  %33 = vset.pattern.permute.xlu0 0
  %34 = vperm.xlu0 %33, %v23
  %v35 = vpop.permute.xlu0 %34
  %36 = vset.pattern.permute.xlu0 0
  %37 = vperm.xlu0 %36, %v24
  %v38 = vpop.permute.xlu0 %37
  %39 = vset.pattern.permute.xlu0 0
  %40 = vperm.xlu0 %39, %v26
  %v41 = vpop.permute.xlu0 %40
  %42 = vset.pattern.permute.xlu0 0
  %43 = vperm.xlu0 %42, %v28
  %v44 = vpop.permute.xlu0 %43
  %45 = vset.pattern.permute.xlu0 0
  %46 = vperm.xlu0 %45, %v29
  %v47 = vpop.permute.xlu0 %46
  %vm48 = vcmp.eq.s32.totalorder %v18, %v32
  %vm49 = vcmp.eq.s32.totalorder %v18, %v35
  %vm50 = vcmp.eq.s32.totalorder %v18, %v38
  %vm51 = vcmp.eq.s32.totalorder %v18, %v41
  %vm52 = vcmp.eq.s32.totalorder %v18, %v44
  %vm53 = vcmp.eq.s32.totalorder %v18, %v47
  %v54 = vsel %vm48, 1.0, 0.0
  %v55 = vsel %vm49, 1.0, 0.0
  %v56 = vsel %vm50, 1.0, 0.0
  %v57 = vsel %vm51, 1.0, 0.0
  %v58 = vsel %vm52, 1.0, 0.0
  %v59 = vsel %vm53, 1.0, 0.0
  %v60 = vld [vmem:[%s1] sm:$0xff]
  %v61 = vld [vmem:[%s1 + $0x8] sm:$0xff]
  %v62 = vld [vmem:[%s1 + $0x10] sm:$0xff]
  %v63 = vld [vmem:[%s1 + $0x18] sm:$0xff]
  %v64 = vld [vmem:[%s1 + $0x20] sm:$0xff]
  %v65 = vld [vmem:[%s1 + $0x28] sm:$0xff]
  %v66 = vld [vmem:[%s1 + $0x30] sm:$0xff]
  %vm67 = vcmask 1042432
  %v68 = vrot.slane %v11, 5
  %v69 = vsel %vm67, 4294967295, %v68
  %v70 = vrot.slane %v12, 5
  %v71 = vsel %vm67, %v68, %v70
  %v72 = vsel %vm67, %v70, 4294967295
  %v73 = vrot.slane %v14, 5
  %v74 = vsel %vm67, 4294967295, %v73
  %v75 = vrot.slane %v16, 5
  %v76 = vsel %vm67, %v73, %v75
  %v77 = vsel %vm67, %v75, 4294967295
  %78 = vset.pattern.permute.xlu0 0
  %79 = vperm.xlu0 %78, %v69
  %v80 = vpop.permute.xlu0 %79
  %81 = vset.pattern.permute.xlu0 0
  %82 = vperm.xlu0 %81, %v71
  %v83 = vpop.permute.xlu0 %82
  %84 = vset.pattern.permute.xlu0 0
  %85 = vperm.xlu0 %84, %v72
  %v86 = vpop.permute.xlu0 %85
  %87 = vset.pattern.permute.xlu0 0
  %88 = vperm.xlu0 %87, %v74
  %v89 = vpop.permute.xlu0 %88
  %90 = vset.pattern.permute.xlu0 0
  %91 = vperm.xlu0 %90, %v76
  %v92 = vpop.permute.xlu0 %91
  %93 = vset.pattern.permute.xlu0 0
  %94 = vperm.xlu0 %93, %v77
  %v95 = vpop.permute.xlu0 %94
  %vm96 = vcmp.eq.s32.totalorder %v18, %v80
  %vm97 = vcmp.eq.s32.totalorder %v18, %v83
  %vm98 = vcmp.eq.s32.totalorder %v18, %v86
  %vm99 = vcmp.eq.s32.totalorder %v18, %v89
  %vm100 = vcmp.eq.s32.totalorder %v18, %v92
  %vm101 = vcmp.eq.s32.totalorder %v18, %v95
  %v102 = vsel %vm96, 1.0, 0.0
  %v103 = vsel %vm97, 1.0, 0.0
  %v104 = vsel %vm98, 1.0, 0.0
  %v105 = vsel %vm99, 1.0, 0.0
  %v106 = vsel %vm100, 1.0, 0.0
  %v107 = vsel %vm101, 1.0, 0.0
  %v108 = vld [vmem:[%s1 + $0x38] sm:$0xff]
  %v109 = vld [vmem:[%s1 + $0x40] sm:$0xff]
  %v110 = vld [vmem:[%s1 + $0x48] sm:$0xff]
  %v111 = vld [vmem:[%s1 + $0x50] sm:$0xff]
  %v112 = vld [vmem:[%s1 + $0x58] sm:$0xff]
  %v113 = vld [vmem:[%s1 + $0x60] sm:$0xff]
  %v114 = vld [vmem:[%s1 + $0x68] sm:$0xff]
  %vm115 = vcmask 457728
  %v117 = vsel %vm115, %v102, 0
  %v120 = vsel %vm115, %v103, 0
  %v123 = vsel %vm115, %v104, 0
  %v126 = vsel %vm115, %v105, 0
  %v129 = vsel %vm115, %v106, 0
  %v132 = vsel %vm115, %v107, 0
  %134 = vmatprep.subr.mxu0 0.0
  %135 = vmatpush1.msra.mxu0 0.0
  %136 = vmatprep.subr.mxu0 0.0
  %137 = vmatpush1.msra.mxu0 0.0
  %138 = vmatprep.subr.mxu0 0.0
  %139 = vmatpush1.msra.mxu0 0.0
  %140 = vmatprep.subr.mxu0 0.0
  %141 = vmatpush1.msra.mxu0 0.0
  %142 = vmatprep.subr.mxu0 0.0
  %143 = vmatpush1.msra.mxu0 0.0
  %144 = vmatprep.subr.mxu0 0.0
  %145 = vmatpush1.msra.mxu0 0.0
  %146 = vmatprep.subr.mxu0 0.0
  %147 = vmatpush1.msra.mxu0 0.0
  %148 = vmatprep.subr.mxu0 0.0
  %149 = vmatpush1.msra.mxu0 0.0
  %150 = vmatprep.subr.mxu0 0.0
  %151 = vmatpush1.msra.mxu0 0.0
  %152 = vmatprep.subr.mxu0 0.0
  %153 = vmatpush1.msra.mxu0 %v114
  %154 = vmatprep.subr.mxu0 0.0
  %155 = vmatpush1.msra.mxu0 %v113
  %156 = vmatprep.subr.mxu0 0.0
  %157 = vmatpush1.msra.mxu0 %v112
  %158 = vmatprep.subr.mxu0 0.0
  %159 = vmatpush1.msra.mxu0 %v111
  %160 = vmatprep.subr.mxu0 0.0
  %161 = vmatpush1.msra.mxu0 %v110
  %162 = vmatprep.subr.mxu0 0.0
  %163 = vmatpush1.msra.mxu0 %v109
  %164 = vmatprep.subr.mxu0 0.0
  %165 = vmatpush1.msra.mxu0 %v108
  %166 = vmatprep.subr.mxu0 0.0
  %167 = vmatpush2.msra.mxu0 0.0
  %168 = vmatprep.subr.mxu0 0.0
  %169 = vmatpush2.msra.mxu0 0.0
  %170 = vmatprep.subr.mxu0 0.0
  %171 = vmatpush2.msra.mxu0 0.0
  %172 = vmatprep.subr.mxu0 0.0
  %173 = vmatpush2.msra.mxu0 0.0
  %174 = vmatprep.subr.mxu0 0.0
  %175 = vmatpush2.msra.mxu0 0.0
  %176 = vmatprep.subr.mxu0 0.0
  %177 = vmatpush2.msra.mxu0 0.0
  %178 = vmatprep.subr.mxu0 0.0
  %179 = vmatpush2.msra.mxu0 0.0
  %180 = vmatprep.subr.mxu0 0.0
  %181 = vmatpush2.msra.mxu0 0.0
  %182 = vmatprep.subr.mxu0 0.0
  %183 = vmatpush2.msra.mxu0 0.0
  %184 = vmatprep.subr.mxu0 0.0
  %185 = vmatpush2.msra.mxu0 0.0
  %186 = vmatprep.subr.mxu0 0.0
  %187 = vmatpush2.msra.mxu0 0.0
  %188 = vmatprep.subr.mxu0 0.0
  %189 = vmatpush2.msra.mxu0 0.0
  %190 = vmatprep.subr.mxu0 0.0
  %191 = vmatpush2.msra.mxu0 0.0
  %192 = vmatprep.subr.mxu0 0.0
  %193 = vmatpush2.msra.mxu0 0.0
  %194 = vmatprep.subr.mxu0 0.0
  %195 = vmatpush2.msra.mxu0 0.0
  %196 = vmatprep.subr.mxu0 0.0
  %197 = vmatpush2.msra.mxu0 0.0
  %198 = vmatprep.mubr.f32.mxu0 0.0
  %199 = vmatmul.mubr.f32.gmra.mxu0 %v117
  %v200 = vpop.f32.mrf.mxu0
  %v201 = vadd.f32 0.0, %v200
  %v202 = vpop.f32.mrf.mxu0
  %203 = vmatprep.mubr.f32.mxu0 0.0
  %204 = vmatmul.mubr.f32.gmra.mxu0 %v120
  %v205 = vpop.f32.mrf.mxu0
  %v206 = vadd.f32 0.0, %v205
  %v207 = vpop.f32.mrf.mxu0
  %208 = vmatprep.mubr.f32.mxu0 0.0
  %209 = vmatmul.mubr.f32.gmra.mxu0 %v123
  %v210 = vpop.f32.mrf.mxu0
  %v211 = vadd.f32 0.0, %v210
  %v212 = vpop.f32.mrf.mxu0
  %213 = vmatprep.mubr.f32.mxu0 0.0
  %214 = vmatmul.mubr.f32.gmra.mxu0 %v126
  %v215 = vpop.f32.mrf.mxu0
  %v216 = vadd.f32 0.0, %v215
  %v217 = vpop.f32.mrf.mxu0
  %218 = vmatprep.mubr.f32.mxu0 0.0
  %219 = vmatmul.mubr.f32.gmra.mxu0 %v129
  %v220 = vpop.f32.mrf.mxu0
  %v221 = vadd.f32 0.0, %v220
  %v222 = vpop.f32.mrf.mxu0
  %223 = vmatprep.mubr.f32.mxu0 0.0
  %224 = vmatmul.mubr.f32.gmra.mxu0 %v132
  %v225 = vpop.f32.mrf.mxu0
  %v226 = vadd.f32 0.0, %v225
  %v227 = vpop.f32.mrf.mxu0
  %228 = vdwg.mxu0
  %v230 = vsel %vm115, %v54, 0
  %v233 = vsel %vm115, %v55, 0
  %v236 = vsel %vm115, %v56, 0
  %v239 = vsel %vm115, %v57, 0
  %v242 = vsel %vm115, %v58, 0
  %v245 = vsel %vm115, %v59, 0
  %247 = vmatprep.subr.mxu0 0.0
  %248 = vmatpush1.msra.mxu0 0.0
  %249 = vmatprep.subr.mxu0 0.0
  %250 = vmatpush1.msra.mxu0 0.0
  %251 = vmatprep.subr.mxu0 0.0
  %252 = vmatpush1.msra.mxu0 0.0
  %253 = vmatprep.subr.mxu0 0.0
  %254 = vmatpush1.msra.mxu0 0.0
  %255 = vmatprep.subr.mxu0 0.0
  %256 = vmatpush1.msra.mxu0 0.0
  %257 = vmatprep.subr.mxu0 0.0
  %258 = vmatpush1.msra.mxu0 0.0
  %259 = vmatprep.subr.mxu0 0.0
  %260 = vmatpush1.msra.mxu0 0.0
  %261 = vmatprep.subr.mxu0 0.0
  %262 = vmatpush1.msra.mxu0 0.0
  %263 = vmatprep.subr.mxu0 0.0
  %264 = vmatpush1.msra.mxu0 0.0
  %265 = vmatprep.subr.mxu0 0.0
  %266 = vmatpush1.msra.mxu0 %v66
  %267 = vmatprep.subr.mxu0 0.0
  %268 = vmatpush1.msra.mxu0 %v65
  %269 = vmatprep.subr.mxu0 0.0
  %270 = vmatpush1.msra.mxu0 %v64
  %271 = vmatprep.subr.mxu0 0.0
  %272 = vmatpush1.msra.mxu0 %v63
  %273 = vmatprep.subr.mxu0 0.0
  %274 = vmatpush1.msra.mxu0 %v62
  %275 = vmatprep.subr.mxu0 0.0
  %276 = vmatpush1.msra.mxu0 %v61
  %277 = vmatprep.subr.mxu0 0.0
  %278 = vmatpush1.msra.mxu0 %v60
  %279 = vmatprep.subr.mxu0 0.0
  %280 = vmatpush2.msra.mxu0 0.0
  %281 = vmatprep.subr.mxu0 0.0
  %282 = vmatpush2.msra.mxu0 0.0
  %283 = vmatprep.subr.mxu0 0.0
  %284 = vmatpush2.msra.mxu0 0.0
  %285 = vmatprep.subr.mxu0 0.0
  %286 = vmatpush2.msra.mxu0 0.0
  %287 = vmatprep.subr.mxu0 0.0
  %288 = vmatpush2.msra.mxu0 0.0
  %289 = vmatprep.subr.mxu0 0.0
  %290 = vmatpush2.msra.mxu0 0.0
  %291 = vmatprep.subr.mxu0 0.0
  %292 = vmatpush2.msra.mxu0 0.0
  %293 = vmatprep.subr.mxu0 0.0
  %294 = vmatpush2.msra.mxu0 0.0
  %295 = vmatprep.subr.mxu0 0.0
  %296 = vmatpush2.msra.mxu0 0.0
  %297 = vmatprep.subr.mxu0 0.0
  %298 = vmatpush2.msra.mxu0 0.0
  %299 = vmatprep.subr.mxu0 0.0
  %300 = vmatpush2.msra.mxu0 0.0
  %301 = vmatprep.subr.mxu0 0.0
  %302 = vmatpush2.msra.mxu0 0.0
  %303 = vmatprep.subr.mxu0 0.0
  %304 = vmatpush2.msra.mxu0 0.0
  %305 = vmatprep.subr.mxu0 0.0
  %306 = vmatpush2.msra.mxu0 0.0
  %307 = vmatprep.subr.mxu0 0.0
  %308 = vmatpush2.msra.mxu0 0.0
  %309 = vmatprep.subr.mxu0 0.0
  %310 = vmatpush2.msra.mxu0 0.0
  %311 = vmatprep.mubr.f32.mxu0 0.0
  %312 = vmatmul.mubr.f32.gmra.mxu0 %v230
  %v313 = vpop.f32.mrf.mxu0
  %v314 = vadd.f32 %v201, %v313
  %v315 = vpop.f32.mrf.mxu0
  %316 = vmatprep.mubr.f32.mxu0 0.0
  %317 = vmatmul.mubr.f32.gmra.mxu0 %v233
  %v318 = vpop.f32.mrf.mxu0
  %v319 = vadd.f32 %v206, %v318
  %v320 = vpop.f32.mrf.mxu0
  %321 = vmatprep.mubr.f32.mxu0 0.0
  %322 = vmatmul.mubr.f32.gmra.mxu0 %v236
  %v323 = vpop.f32.mrf.mxu0
  %v324 = vadd.f32 %v211, %v323
  %v325 = vpop.f32.mrf.mxu0
  %326 = vmatprep.mubr.f32.mxu0 0.0
  %327 = vmatmul.mubr.f32.gmra.mxu0 %v239
  %v328 = vpop.f32.mrf.mxu0
  %v329 = vadd.f32 %v216, %v328
  %v330 = vpop.f32.mrf.mxu0
  %331 = vmatprep.mubr.f32.mxu0 0.0
  %332 = vmatmul.mubr.f32.gmra.mxu0 %v242
  %v333 = vpop.f32.mrf.mxu0
  %v334 = vadd.f32 %v221, %v333
  %v335 = vpop.f32.mrf.mxu0
  %336 = vmatprep.mubr.f32.mxu0 0.0
  %337 = vmatmul.mubr.f32.gmra.mxu0 %v245
  %v338 = vpop.f32.mrf.mxu0
  %v339 = vadd.f32 %v226, %v338
  %v340 = vpop.f32.mrf.mxu0
  %341 = vdwg.mxu0
  %vm342 = vcmask 1041408
  %v343 = vrot.slane %v11, 6
  %v344 = vsel %vm342, 4294967295, %v343
  %v345 = vrot.slane %v12, 6
  %v346 = vsel %vm342, %v343, %v345
  %v347 = vsel %vm342, %v345, 4294967295
  %v348 = vrot.slane %v14, 6
  %v349 = vsel %vm342, 4294967295, %v348
  %v350 = vrot.slane %v16, 6
  %v351 = vsel %vm342, %v348, %v350
  %v352 = vsel %vm342, %v350, 4294967295
  %353 = vset.pattern.permute.xlu0 0
  %354 = vperm.xlu0 %353, %v344
  %v355 = vpop.permute.xlu0 %354
  %356 = vset.pattern.permute.xlu0 0
  %357 = vperm.xlu0 %356, %v346
  %v358 = vpop.permute.xlu0 %357
  %359 = vset.pattern.permute.xlu0 0
  %360 = vperm.xlu0 %359, %v347
  %v361 = vpop.permute.xlu0 %360
  %362 = vset.pattern.permute.xlu0 0
  %363 = vperm.xlu0 %362, %v349
  %v364 = vpop.permute.xlu0 %363
  %365 = vset.pattern.permute.xlu0 0
  %366 = vperm.xlu0 %365, %v351
  %v367 = vpop.permute.xlu0 %366
  %368 = vset.pattern.permute.xlu0 0
  %369 = vperm.xlu0 %368, %v352
  %v370 = vpop.permute.xlu0 %369
  %vm371 = vcmp.eq.s32.totalorder %v18, %v355
  %vm372 = vcmp.eq.s32.totalorder %v18, %v358
  %vm373 = vcmp.eq.s32.totalorder %v18, %v361
  %vm374 = vcmp.eq.s32.totalorder %v18, %v364
  %vm375 = vcmp.eq.s32.totalorder %v18, %v367
  %vm376 = vcmp.eq.s32.totalorder %v18, %v370
  %v377 = vsel %vm371, 1.0, 0.0
  %v378 = vsel %vm372, 1.0, 0.0
  %v379 = vsel %vm373, 1.0, 0.0
  %v380 = vsel %vm374, 1.0, 0.0
  %v381 = vsel %vm375, 1.0, 0.0
  %v382 = vsel %vm376, 1.0, 0.0
  %v383 = vld [vmem:[%s1 + $0x70] sm:$0xff]
  %v384 = vld [vmem:[%s1 + $0x78] sm:$0xff]
  %v385 = vld [vmem:[%s1 + $0x80] sm:$0xff]
  %v386 = vld [vmem:[%s1 + $0x88] sm:$0xff]
  %v387 = vld [vmem:[%s1 + $0x90] sm:$0xff]
  %v388 = vld [vmem:[%s1 + $0x98] sm:$0xff]
  %v389 = vld [vmem:[%s1 + $0xa0] sm:$0xff]
  %v391 = vsel %vm115, %v377, 0
  %v394 = vsel %vm115, %v378, 0
  %v397 = vsel %vm115, %v379, 0
  %v400 = vsel %vm115, %v380, 0
  %v403 = vsel %vm115, %v381, 0
  %v406 = vsel %vm115, %v382, 0
  %408 = vmatprep.subr.mxu0 0.0
  %409 = vmatpush1.msra.mxu0 0.0
  %410 = vmatprep.subr.mxu0 0.0
  %411 = vmatpush1.msra.mxu0 0.0
  %412 = vmatprep.subr.mxu0 0.0
  %413 = vmatpush1.msra.mxu0 0.0
  %414 = vmatprep.subr.mxu0 0.0
  %415 = vmatpush1.msra.mxu0 0.0
  %416 = vmatprep.subr.mxu0 0.0
  %417 = vmatpush1.msra.mxu0 0.0
  %418 = vmatprep.subr.mxu0 0.0
  %419 = vmatpush1.msra.mxu0 0.0
  %420 = vmatprep.subr.mxu0 0.0
  %421 = vmatpush1.msra.mxu0 0.0
  %422 = vmatprep.subr.mxu0 0.0
  %423 = vmatpush1.msra.mxu0 0.0
  %424 = vmatprep.subr.mxu0 0.0
  %425 = vmatpush1.msra.mxu0 0.0
  %426 = vmatprep.subr.mxu0 0.0
  %427 = vmatpush1.msra.mxu0 %v389
  %428 = vmatprep.subr.mxu0 0.0
  %429 = vmatpush1.msra.mxu0 %v388
  %430 = vmatprep.subr.mxu0 0.0
  %431 = vmatpush1.msra.mxu0 %v387
  %432 = vmatprep.subr.mxu0 0.0
  %433 = vmatpush1.msra.mxu0 %v386
  %434 = vmatprep.subr.mxu0 0.0
  %435 = vmatpush1.msra.mxu0 %v385
  %436 = vmatprep.subr.mxu0 0.0
  %437 = vmatpush1.msra.mxu0 %v384
  %438 = vmatprep.subr.mxu0 0.0
  %439 = vmatpush1.msra.mxu0 %v383
  %440 = vmatprep.subr.mxu0 0.0
  %441 = vmatpush2.msra.mxu0 0.0
  %442 = vmatprep.subr.mxu0 0.0
  %443 = vmatpush2.msra.mxu0 0.0
  %444 = vmatprep.subr.mxu0 0.0
  %445 = vmatpush2.msra.mxu0 0.0
  %446 = vmatprep.subr.mxu0 0.0
  %447 = vmatpush2.msra.mxu0 0.0
  %448 = vmatprep.subr.mxu0 0.0
  %449 = vmatpush2.msra.mxu0 0.0
  %450 = vmatprep.subr.mxu0 0.0
  %451 = vmatpush2.msra.mxu0 0.0
  %452 = vmatprep.subr.mxu0 0.0
  %453 = vmatpush2.msra.mxu0 0.0
  %454 = vmatprep.subr.mxu0 0.0
  %455 = vmatpush2.msra.mxu0 0.0
  %456 = vmatprep.subr.mxu0 0.0
  %457 = vmatpush2.msra.mxu0 0.0
  %458 = vmatprep.subr.mxu0 0.0
  %459 = vmatpush2.msra.mxu0 0.0
  %460 = vmatprep.subr.mxu0 0.0
  %461 = vmatpush2.msra.mxu0 0.0
  %462 = vmatprep.subr.mxu0 0.0
  %463 = vmatpush2.msra.mxu0 0.0
  %464 = vmatprep.subr.mxu0 0.0
  %465 = vmatpush2.msra.mxu0 0.0
  %466 = vmatprep.subr.mxu0 0.0
  %467 = vmatpush2.msra.mxu0 0.0
  %468 = vmatprep.subr.mxu0 0.0
  %469 = vmatpush2.msra.mxu0 0.0
  %470 = vmatprep.subr.mxu0 0.0
  %471 = vmatpush2.msra.mxu0 0.0
  %472 = vmatprep.mubr.f32.mxu0 0.0
  %473 = vmatmul.mubr.f32.gmra.mxu0 %v391
  %v474 = vpop.f32.mrf.mxu0
  %v475 = vadd.f32 0.0, %v474
  %v476 = vpop.f32.mrf.mxu0
  %477 = vmatprep.mubr.f32.mxu0 0.0
  %478 = vmatmul.mubr.f32.gmra.mxu0 %v394
  %v479 = vpop.f32.mrf.mxu0
  %v480 = vadd.f32 0.0, %v479
  %v481 = vpop.f32.mrf.mxu0
  %482 = vmatprep.mubr.f32.mxu0 0.0
  %483 = vmatmul.mubr.f32.gmra.mxu0 %v397
  %v484 = vpop.f32.mrf.mxu0
  %v485 = vadd.f32 0.0, %v484
  %v486 = vpop.f32.mrf.mxu0
  %487 = vmatprep.mubr.f32.mxu0 0.0
  %488 = vmatmul.mubr.f32.gmra.mxu0 %v400
  %v489 = vpop.f32.mrf.mxu0
  %v490 = vadd.f32 0.0, %v489
  %v491 = vpop.f32.mrf.mxu0
  %492 = vmatprep.mubr.f32.mxu0 0.0
  %493 = vmatmul.mubr.f32.gmra.mxu0 %v403
  %v494 = vpop.f32.mrf.mxu0
  %v495 = vadd.f32 0.0, %v494
  %v496 = vpop.f32.mrf.mxu0
  %497 = vmatprep.mubr.f32.mxu0 0.0
  %498 = vmatmul.mubr.f32.gmra.mxu0 %v406
  %v499 = vpop.f32.mrf.mxu0
  %v500 = vadd.f32 0.0, %v499
  %v501 = vpop.f32.mrf.mxu0
  %502 = vdwg.mxu0
  %v503 = vadd.f32 %v314, %v475
  %v504 = vadd.f32 %v319, %v480
  %v505 = vadd.f32 %v324, %v485
  %v506 = vadd.f32 %v329, %v490
  %v507 = vadd.f32 %v334, %v495
  %v508 = vadd.f32 %v339, %v500
  %vm509 = vcmask 1040384
  %v510 = vrot.slane %v11, 7
  %v511 = vsel %vm509, 4294967295, %v510
  %v512 = vrot.slane %v12, 7
  %v513 = vsel %vm509, %v510, %v512
  %v514 = vsel %vm509, %v512, 4294967295
  %v515 = vrot.slane %v14, 7
  %v516 = vsel %vm509, 4294967295, %v515
  %v517 = vrot.slane %v16, 7
  %v518 = vsel %vm509, %v515, %v517
  %v519 = vsel %vm509, %v517, 4294967295
  %520 = vset.pattern.permute.xlu0 0
  %521 = vperm.xlu0 %520, %v511
  %v522 = vpop.permute.xlu0 %521
  %523 = vset.pattern.permute.xlu0 0
  %524 = vperm.xlu0 %523, %v513
  %v525 = vpop.permute.xlu0 %524
  %526 = vset.pattern.permute.xlu0 0
  %527 = vperm.xlu0 %526, %v514
  %v528 = vpop.permute.xlu0 %527
  %529 = vset.pattern.permute.xlu0 0
  %530 = vperm.xlu0 %529, %v516
  %v531 = vpop.permute.xlu0 %530
  %532 = vset.pattern.permute.xlu0 0
  %533 = vperm.xlu0 %532, %v518
  %v534 = vpop.permute.xlu0 %533
  %535 = vset.pattern.permute.xlu0 0
  %536 = vperm.xlu0 %535, %v519
  %v537 = vpop.permute.xlu0 %536
  %vm538 = vcmp.eq.s32.totalorder %v18, %v522
  %vm539 = vcmp.eq.s32.totalorder %v18, %v525
  %vm540 = vcmp.eq.s32.totalorder %v18, %v528
  %vm541 = vcmp.eq.s32.totalorder %v18, %v531
  %vm542 = vcmp.eq.s32.totalorder %v18, %v534
  %vm543 = vcmp.eq.s32.totalorder %v18, %v537
  %v544 = vsel %vm538, 1.0, 0.0
  %v545 = vsel %vm539, 1.0, 0.0
  %v546 = vsel %vm540, 1.0, 0.0
  %v547 = vsel %vm541, 1.0, 0.0
  %v548 = vsel %vm542, 1.0, 0.0
  %v549 = vsel %vm543, 1.0, 0.0
  %v550 = vld [vmem:[%s1 + $0xa8] sm:$0xff]
  %v551 = vld [vmem:[%s1 + $0xb0] sm:$0xff]
  %v552 = vld [vmem:[%s1 + $0xb8] sm:$0xff]
  %v553 = vld [vmem:[%s1 + $0xc0] sm:$0xff]
  %v554 = vld [vmem:[%s1 + $0xc8] sm:$0xff]
  %v555 = vld [vmem:[%s1 + $0xd0] sm:$0xff]
  %v556 = vld [vmem:[%s1 + $0xd8] sm:$0xff]
  %v558 = vsel %vm115, %v544, 0
  %v561 = vsel %vm115, %v545, 0
  %v564 = vsel %vm115, %v546, 0
  %v567 = vsel %vm115, %v547, 0
  %v570 = vsel %vm115, %v548, 0
  %v573 = vsel %vm115, %v549, 0
  %575 = vmatprep.subr.mxu0 0.0
  %576 = vmatpush1.msra.mxu0 0.0
  %577 = vmatprep.subr.mxu0 0.0
  %578 = vmatpush1.msra.mxu0 0.0
  %579 = vmatprep.subr.mxu0 0.0
  %580 = vmatpush1.msra.mxu0 0.0
  %581 = vmatprep.subr.mxu0 0.0
  %582 = vmatpush1.msra.mxu0 0.0
  %583 = vmatprep.subr.mxu0 0.0
  %584 = vmatpush1.msra.mxu0 0.0
  %585 = vmatprep.subr.mxu0 0.0
  %586 = vmatpush1.msra.mxu0 0.0
  %587 = vmatprep.subr.mxu0 0.0
  %588 = vmatpush1.msra.mxu0 0.0
  %589 = vmatprep.subr.mxu0 0.0
  %590 = vmatpush1.msra.mxu0 0.0
  %591 = vmatprep.subr.mxu0 0.0
  %592 = vmatpush1.msra.mxu0 0.0
  %593 = vmatprep.subr.mxu0 0.0
  %594 = vmatpush1.msra.mxu0 %v556
  %595 = vmatprep.subr.mxu0 0.0
  %596 = vmatpush1.msra.mxu0 %v555
  %597 = vmatprep.subr.mxu0 0.0
  %598 = vmatpush1.msra.mxu0 %v554
  %599 = vmatprep.subr.mxu0 0.0
  %600 = vmatpush1.msra.mxu0 %v553
  %601 = vmatprep.subr.mxu0 0.0
  %602 = vmatpush1.msra.mxu0 %v552
  %603 = vmatprep.subr.mxu0 0.0
  %604 = vmatpush1.msra.mxu0 %v551
  %605 = vmatprep.subr.mxu0 0.0
  %606 = vmatpush1.msra.mxu0 %v550
  %607 = vmatprep.subr.mxu0 0.0
  %608 = vmatpush2.msra.mxu0 0.0
  %609 = vmatprep.subr.mxu0 0.0
  %610 = vmatpush2.msra.mxu0 0.0
  %611 = vmatprep.subr.mxu0 0.0
  %612 = vmatpush2.msra.mxu0 0.0
  %613 = vmatprep.subr.mxu0 0.0
  %614 = vmatpush2.msra.mxu0 0.0
  %615 = vmatprep.subr.mxu0 0.0
  %616 = vmatpush2.msra.mxu0 0.0
  %617 = vmatprep.subr.mxu0 0.0
  %618 = vmatpush2.msra.mxu0 0.0
  %619 = vmatprep.subr.mxu0 0.0
  %620 = vmatpush2.msra.mxu0 0.0
  %621 = vmatprep.subr.mxu0 0.0
  %622 = vmatpush2.msra.mxu0 0.0
  %623 = vmatprep.subr.mxu0 0.0
  %624 = vmatpush2.msra.mxu0 0.0
  %625 = vmatprep.subr.mxu0 0.0
  %626 = vmatpush2.msra.mxu0 0.0
  %627 = vmatprep.subr.mxu0 0.0
  %628 = vmatpush2.msra.mxu0 0.0
  %629 = vmatprep.subr.mxu0 0.0
  %630 = vmatpush2.msra.mxu0 0.0
  %631 = vmatprep.subr.mxu0 0.0
  %632 = vmatpush2.msra.mxu0 0.0
  %633 = vmatprep.subr.mxu0 0.0
  %634 = vmatpush2.msra.mxu0 0.0
  %635 = vmatprep.subr.mxu0 0.0
  %636 = vmatpush2.msra.mxu0 0.0
  %637 = vmatprep.subr.mxu0 0.0
  %638 = vmatpush2.msra.mxu0 0.0
  %639 = vmatprep.mubr.f32.mxu0 0.0
  %640 = vmatmul.mubr.f32.gmra.mxu0 %v558
  %v641 = vpop.f32.mrf.mxu0
  %v642 = vadd.f32 0.0, %v641
  %v643 = vpop.f32.mrf.mxu0
  %644 = vmatprep.mubr.f32.mxu0 0.0
  %645 = vmatmul.mubr.f32.gmra.mxu0 %v561
  %v646 = vpop.f32.mrf.mxu0
  %v647 = vadd.f32 0.0, %v646
  %v648 = vpop.f32.mrf.mxu0
  %649 = vmatprep.mubr.f32.mxu0 0.0
  %650 = vmatmul.mubr.f32.gmra.mxu0 %v564
  %v651 = vpop.f32.mrf.mxu0
  %v652 = vadd.f32 0.0, %v651
  %v653 = vpop.f32.mrf.mxu0
  %654 = vmatprep.mubr.f32.mxu0 0.0
  %655 = vmatmul.mubr.f32.gmra.mxu0 %v567
  %v656 = vpop.f32.mrf.mxu0
  %v657 = vadd.f32 0.0, %v656
  %v658 = vpop.f32.mrf.mxu0
  %659 = vmatprep.mubr.f32.mxu0 0.0
  %660 = vmatmul.mubr.f32.gmra.mxu0 %v570
  %v661 = vpop.f32.mrf.mxu0
  %v662 = vadd.f32 0.0, %v661
  %v663 = vpop.f32.mrf.mxu0
  %664 = vmatprep.mubr.f32.mxu0 0.0
  %665 = vmatmul.mubr.f32.gmra.mxu0 %v573
  %v666 = vpop.f32.mrf.mxu0
  %v667 = vadd.f32 0.0, %v666
  %v668 = vpop.f32.mrf.mxu0
  %669 = vdwg.mxu0
  %v670 = vadd.f32 %v503, %v642
  %v671 = vadd.f32 %v504, %v647
  %v672 = vadd.f32 %v505, %v652
  %v673 = vadd.f32 %v506, %v657
  %v674 = vadd.f32 %v507, %v662
  %v675 = vadd.f32 %v508, %v667
  %676 = vset.pattern.permute.xlu0 0
  %677 = vperm.xlu0 %676, %v11
  %v678 = vpop.permute.xlu0 %677
  %679 = vset.pattern.permute.xlu0 0
  %680 = vperm.xlu0 %679, %v12
  %v681 = vpop.permute.xlu0 %680
  %682 = vset.pattern.permute.xlu0 0
  %683 = vperm.xlu0 %682, 4294967295
  %v684 = vpop.permute.xlu0 %683
  %685 = vset.pattern.permute.xlu0 0
  %686 = vperm.xlu0 %685, %v14
  %v687 = vpop.permute.xlu0 %686
  %688 = vset.pattern.permute.xlu0 0
  %689 = vperm.xlu0 %688, %v16
  %v690 = vpop.permute.xlu0 %689
  %vm691 = vcmp.eq.s32.totalorder %v18, %v678
  %vm692 = vcmp.eq.s32.totalorder %v18, %v681
  %vm693 = vcmp.eq.s32.totalorder %v18, %v684
  %vm694 = vcmp.eq.s32.totalorder %v18, %v687
  %vm695 = vcmp.eq.s32.totalorder %v18, %v690
  %v696 = vsel %vm691, 1.0, 0.0
  %v697 = vsel %vm692, 1.0, 0.0
  %v698 = vsel %vm693, 1.0, 0.0
  %v699 = vsel %vm694, 1.0, 0.0
  %v700 = vsel %vm695, 1.0, 0.0
  %v701 = vld [vmem:[%s1 + $0xe0] sm:$0xff]
  %v702 = vld [vmem:[%s1 + $0xe8] sm:$0xff]
  %v703 = vld [vmem:[%s1 + $0xf0] sm:$0xff]
  %v704 = vld [vmem:[%s1 + $0xf8] sm:$0xff]
  %v705 = vld [vmem:[%s1 + $0x100] sm:$0xff]
  %v706 = vld [vmem:[%s1 + $0x108] sm:$0xff]
  %v707 = vld [vmem:[%s1 + $0x110] sm:$0xff]
  %v709 = vsel %vm115, %v696, 0
  %v712 = vsel %vm115, %v697, 0
  %v715 = vsel %vm115, %v698, 0
  %v718 = vsel %vm115, %v699, 0
  %v721 = vsel %vm115, %v700, 0
  %723 = vmatprep.subr.mxu0 0.0
  %724 = vmatpush1.msra.mxu0 0.0
  %725 = vmatprep.subr.mxu0 0.0
  %726 = vmatpush1.msra.mxu0 0.0
  %727 = vmatprep.subr.mxu0 0.0
  %728 = vmatpush1.msra.mxu0 0.0
  %729 = vmatprep.subr.mxu0 0.0
  %730 = vmatpush1.msra.mxu0 0.0
  %731 = vmatprep.subr.mxu0 0.0
  %732 = vmatpush1.msra.mxu0 0.0
  %733 = vmatprep.subr.mxu0 0.0
  %734 = vmatpush1.msra.mxu0 0.0
  %735 = vmatprep.subr.mxu0 0.0
  %736 = vmatpush1.msra.mxu0 0.0
  %737 = vmatprep.subr.mxu0 0.0
  %738 = vmatpush1.msra.mxu0 0.0
  %739 = vmatprep.subr.mxu0 0.0
  %740 = vmatpush1.msra.mxu0 0.0
  %741 = vmatprep.subr.mxu0 0.0
  %742 = vmatpush1.msra.mxu0 %v707
  %743 = vmatprep.subr.mxu0 0.0
  %744 = vmatpush1.msra.mxu0 %v706
  %745 = vmatprep.subr.mxu0 0.0
  %746 = vmatpush1.msra.mxu0 %v705
  %747 = vmatprep.subr.mxu0 0.0
  %748 = vmatpush1.msra.mxu0 %v704
  %749 = vmatprep.subr.mxu0 0.0
  %750 = vmatpush1.msra.mxu0 %v703
  %751 = vmatprep.subr.mxu0 0.0
  %752 = vmatpush1.msra.mxu0 %v702
  %753 = vmatprep.subr.mxu0 0.0
  %754 = vmatpush1.msra.mxu0 %v701
  %755 = vmatprep.subr.mxu0 0.0
  %756 = vmatpush2.msra.mxu0 0.0
  %757 = vmatprep.subr.mxu0 0.0
  %758 = vmatpush2.msra.mxu0 0.0
  %759 = vmatprep.subr.mxu0 0.0
  %760 = vmatpush2.msra.mxu0 0.0
  %761 = vmatprep.subr.mxu0 0.0
  %762 = vmatpush2.msra.mxu0 0.0
  %763 = vmatprep.subr.mxu0 0.0
  %764 = vmatpush2.msra.mxu0 0.0
  %765 = vmatprep.subr.mxu0 0.0
  %766 = vmatpush2.msra.mxu0 0.0
  %767 = vmatprep.subr.mxu0 0.0
  %768 = vmatpush2.msra.mxu0 0.0
  %769 = vmatprep.subr.mxu0 0.0
  %770 = vmatpush2.msra.mxu0 0.0
  %771 = vmatprep.subr.mxu0 0.0
  %772 = vmatpush2.msra.mxu0 0.0
  %773 = vmatprep.subr.mxu0 0.0
  %774 = vmatpush2.msra.mxu0 0.0
  %775 = vmatprep.subr.mxu0 0.0
  %776 = vmatpush2.msra.mxu0 0.0
  %777 = vmatprep.subr.mxu0 0.0
  %778 = vmatpush2.msra.mxu0 0.0
  %779 = vmatprep.subr.mxu0 0.0
  %780 = vmatpush2.msra.mxu0 0.0
  %781 = vmatprep.subr.mxu0 0.0
  %782 = vmatpush2.msra.mxu0 0.0
  %783 = vmatprep.subr.mxu0 0.0
  %784 = vmatpush2.msra.mxu0 0.0
  %785 = vmatprep.subr.mxu0 0.0
  %786 = vmatpush2.msra.mxu0 0.0
  %787 = vmatprep.mubr.f32.mxu0 0.0
  %788 = vmatmul.mubr.f32.gmra.mxu0 %v709
  %v789 = vpop.f32.mrf.mxu0
  %v790 = vadd.f32 0.0, %v789
  %v791 = vpop.f32.mrf.mxu0
  %792 = vmatprep.mubr.f32.mxu0 0.0
  %793 = vmatmul.mubr.f32.gmra.mxu0 %v712
  %v794 = vpop.f32.mrf.mxu0
  %v795 = vadd.f32 0.0, %v794
  %v796 = vpop.f32.mrf.mxu0
  %797 = vmatprep.mubr.f32.mxu0 0.0
  %798 = vmatmul.mubr.f32.gmra.mxu0 %v715
  %v799 = vpop.f32.mrf.mxu0
  %v800 = vadd.f32 0.0, %v799
  %v801 = vpop.f32.mrf.mxu0
  %802 = vmatprep.mubr.f32.mxu0 0.0
  %803 = vmatmul.mubr.f32.gmra.mxu0 %v718
  %v804 = vpop.f32.mrf.mxu0
  %v805 = vadd.f32 0.0, %v804
  %v806 = vpop.f32.mrf.mxu0
  %807 = vmatprep.mubr.f32.mxu0 0.0
  %808 = vmatmul.mubr.f32.gmra.mxu0 %v721
  %v809 = vpop.f32.mrf.mxu0
  %v810 = vadd.f32 0.0, %v809
  %v811 = vpop.f32.mrf.mxu0
  %812 = vmatprep.mubr.f32.mxu0 0.0
  %813 = vmatmul.mubr.f32.gmra.mxu0 %v715
  %v814 = vpop.f32.mrf.mxu0
  %v815 = vadd.f32 0.0, %v814
  %v816 = vpop.f32.mrf.mxu0
  %817 = vdwg.mxu0
  %v818 = vadd.f32 %v670, %v790
  %v819 = vadd.f32 %v671, %v795
  %v820 = vadd.f32 %v672, %v800
  %v821 = vadd.f32 %v673, %v805
  %v822 = vadd.f32 %v674, %v810
  %v823 = vadd.f32 %v675, %v815
  %v824 = vld [vmem:[%s1 + $0x118] sm:$0xff]
  %v825 = vld [vmem:[%s1 + $0x120] sm:$0xff]
  %v826 = vld [vmem:[%s1 + $0x128] sm:$0xff]
  %v827 = vadd.f32 %v818, %v824
  %v828 = vadd.f32 %v819, %v825
  %v829 = vadd.f32 %v820, %v826
  %v830 = vadd.f32 %v821, %v824
  %v831 = vadd.f32 %v822, %v825
  %v832 = vadd.f32 %v823, %v826
  %vm833 = vcmask 195584
  %v834 = vsel %vm833, %v827, -inf
  %v835 = vsel %vm833, %v828, -inf
  %v836 = vsel %vm833, %v829, -inf
  %v837 = vmax.f32 %v834, %v836
  %v838 = vmax.f32 %v837, %v835
  %v839 = vrot.slane %v838, 4
  %v840 = vmax.f32 %v838, %v839
  %v841 = vrot.slane %v840, 2
  %v842 = vmax.f32 %v840, %v841
  %v843 = vrot.slane %v842, 1
  %v844 = vmax.f32 %v842, %v843
  %v845 = vsel %vm833, %v830, -inf
  %v846 = vsel %vm833, %v831, -inf
  %v847 = vsel %vm833, %v832, -inf
  %v848 = vmax.f32 %v845, %v847
  %v849 = vmax.f32 %v848, %v846
  %v850 = vrot.slane %v849, 4
  %v851 = vmax.f32 %v849, %v850
  %v852 = vrot.slane %v851, 2
  %v853 = vmax.f32 %v851, %v852
  %v854 = vrot.slane %v853, 1
  %v855 = vmax.f32 %v853, %v854
  %v856 = vmax.f32 %v844, 0.0
  %v857 = vmax.f32 %v855, 0.0
  %v858 = vld [vmem:[%s1 + $0x130] sm:$0xff]
  %v859 = vld [vmem:[%s1 + $0x138] sm:$0xff]
  %v860 = vld [vmem:[%s1 + $0x140] sm:$0xff]
  %v861 = vld [vmem:[%s1 + $0x148] sm:$0x1]
  %v862 = vlaneseq
  %v863 = vshrl.u32 %v862, 7
  %v864 = vsub.s32 0, %v863
  %v865 = vrot.slane %v861, %v864
  %vm868 = vcmask 1041409
  %v869 = vsel %vm868, %v857, %v856
  %v870 = vsel %vm833, %v869, 0
  %872 = vmatprep.subr.mxu0 0.0
  %873 = vmatpush1.msra.mxu0 0.0
  %874 = vmatprep.subr.mxu0 0.0
  %875 = vmatpush1.msra.mxu0 0.0
  %876 = vmatprep.subr.mxu0 0.0
  %877 = vmatpush1.msra.mxu0 0.0
  %878 = vmatprep.subr.mxu0 0.0
  %879 = vmatpush1.msra.mxu0 0.0
  %880 = vmatprep.subr.mxu0 0.0
  %881 = vmatpush1.msra.mxu0 0.0
  %882 = vmatprep.subr.mxu0 0.0
  %883 = vmatpush1.msra.mxu0 0.0
  %884 = vmatprep.subr.mxu0 0.0
  %885 = vmatpush1.msra.mxu0 0.0
  %886 = vmatprep.subr.mxu0 0.0
  %887 = vmatpush1.msra.mxu0 0.0
  %888 = vmatprep.subr.mxu0 0.0
  %889 = vmatpush1.msra.mxu0 0.0
  %890 = vmatprep.subr.mxu0 0.0
  %891 = vmatpush1.msra.mxu0 0.0
  %892 = vmatprep.subr.mxu0 0.0
  %893 = vmatpush1.msra.mxu0 0.0
  %894 = vmatprep.subr.mxu0 0.0
  %895 = vmatpush1.msra.mxu0 0.0
  %896 = vmatprep.subr.mxu0 0.0
  %897 = vmatpush1.msra.mxu0 0.0
  %898 = vmatprep.subr.mxu0 0.0
  %899 = vmatpush1.msra.mxu0 %v860
  %900 = vmatprep.subr.mxu0 0.0
  %901 = vmatpush1.msra.mxu0 %v859
  %902 = vmatprep.subr.mxu0 0.0
  %903 = vmatpush1.msra.mxu0 %v858
  %904 = vmatprep.subr.mxu0 0.0
  %905 = vmatpush2.msra.mxu0 0.0
  %906 = vmatprep.subr.mxu0 0.0
  %907 = vmatpush2.msra.mxu0 0.0
  %908 = vmatprep.subr.mxu0 0.0
  %909 = vmatpush2.msra.mxu0 0.0
  %910 = vmatprep.subr.mxu0 0.0
  %911 = vmatpush2.msra.mxu0 0.0
  %912 = vmatprep.subr.mxu0 0.0
  %913 = vmatpush2.msra.mxu0 0.0
  %914 = vmatprep.subr.mxu0 0.0
  %915 = vmatpush2.msra.mxu0 0.0
  %916 = vmatprep.subr.mxu0 0.0
  %917 = vmatpush2.msra.mxu0 0.0
  %918 = vmatprep.subr.mxu0 0.0
  %919 = vmatpush2.msra.mxu0 0.0
  %920 = vmatprep.subr.mxu0 0.0
  %921 = vmatpush2.msra.mxu0 0.0
  %922 = vmatprep.subr.mxu0 0.0
  %923 = vmatpush2.msra.mxu0 0.0
  %924 = vmatprep.subr.mxu0 0.0
  %925 = vmatpush2.msra.mxu0 0.0
  %926 = vmatprep.subr.mxu0 0.0
  %927 = vmatpush2.msra.mxu0 0.0
  %928 = vmatprep.subr.mxu0 0.0
  %929 = vmatpush2.msra.mxu0 0.0
  %930 = vmatprep.subr.mxu0 0.0
  %931 = vmatpush2.msra.mxu0 0.0
  %932 = vmatprep.subr.mxu0 0.0
  %933 = vmatpush2.msra.mxu0 0.0
  %934 = vmatprep.subr.mxu0 0.0
  %935 = vmatpush2.msra.mxu0 0.0
  %936 = vmatprep.mubr.f32.mxu0 0.0
  %937 = vmatmul.mubr.f32.gmra.mxu0 %v870
  %v938 = vpop.f32.mrf.mxu0
  %v939 = vadd.f32 %v865, %v938
  %v940 = vpop.f32.mrf.mxu0
  %941 = vdwg.mxu0
  %vm943 = vcmask 189440
  %944 = vst.msk [vmem:[%s2] sm:$0x3] %vm943, %v869
  %946 = vrot.lane.b32.xlu0 %v939, 24
  %v947 = vpop.permute.xlu0 %946
  %vm949 = vcmask 222400
  %950 = vst.msk [vmem:[%s2] sm:$0x3] %vm949, %v947
  // Predicated region
  $region10: #{cnn_text_forward.1} parent=0 // pred_check
    _
  $region11: #{cnn_text_forward.1} parent=0 // pred_check_branch
    %952 = sbr.rel (0) target = $region13
  $region12: #{cnn_text_forward.1} parent=0 // pred_region
    _
  $region13: #{cnn_text_forward.1} parent=0 // pred_fallthru
    _
  // Predicated region
  $region14: #{cnn_text_forward.1} parent=0 // pred_check
    _
  $region15: #{cnn_text_forward.1} parent=0 // pred_check_branch
    %954 = sbr.rel (0) target = $region17
  $region16: #{cnn_text_forward.1} parent=0 // pred_region
    _
  $region17: #{cnn_text_forward.1} parent=0 // pred_fallthru
    _

</llo_original>
